<compile_context>
chip_gen: v5e
topology: v5e:2x2
jax: 0.10.0
libtpu: 0.0.40
codegen_flags: <defaults>
</compile_context>

<pallas_src>
import functools

import jax
import jax.numpy as jnp
from jax import lax
from jax.experimental import pallas as pl
from jax.experimental.pallas import tpu as pltpu


LN_EPS = 1e-5   # PyTorch nn.LayerNorm default
LANE = 128
SUBLANE = 8


def _round_up(x: int, m: int) -> int:
    return (x + m - 1) // m * m


def _pad_to(a, shape):
    pads = [(0, t - s) for s, t in zip(a.shape, shape)]
    return jnp.pad(a, pads)


def _layernorm(x, gamma, beta, true_size):
    """Fused LayerNorm: one pass computes sum and sum-of-squares.

    Divides by the TRUE feature count so it is correct on lane-padded inputs
    whose pad lanes are exactly zero (gamma/beta are zero-padded, so pad lanes
    stay zero in the output as well).
    """
    inv_n = 1.0 / float(true_size)
    s = jnp.sum(x, axis=-1, keepdims=True)
    sq = jnp.sum(x * x, axis=-1, keepdims=True)
    mu = s * inv_n
    var = jnp.maximum(sq * inv_n - mu * mu, 0.0)
    return (x - mu) * lax.rsqrt(var + LN_EPS) * gamma + beta


def simba_kernel(
    x_ref,          # [bb, in_p]        f32
    w_in_ref,       # [in_p, L_p]       bf16
    b_in_ref,       # [1, L_p]          f32
    ln_g_ref,       # [n, 1, L_p]       f32
    ln_b_ref,       # [n, 1, L_p]       f32
    w1_ref,         # [n, L_p, H_p]     bf16
    b1_ref,         # [n, 1, H_p]       f32
    w2_ref,         # [n, H_p, L_p]     bf16
    b2_ref,         # [n, 1, L_p]       f32
    og_ref,         # [1, L_p]          f32
    ob_ref,         # [1, L_p]          f32
    w_out_ref,      # [L_p, out_p]      bf16
    b_out_ref,      # [1, out_p]        f32
    o_ref,          # [bb, out_p]       f32
    *,
    n_layers: int,
    tan_out: bool,
    true_latent: int,
):
    x = x_ref[...]

    # input: Linear(in_size -> latent); bf16 operands, f32 accumulation.
    out = jnp.dot(x.astype(jnp.bfloat16), w_in_ref[...],
                  preferred_element_type=jnp.float32) + b_in_ref[...]

    # n SimBa residual blocks (n is static -> unrolled Python loop).
    for i in range(n_layers):
        res = out
        gamma = ln_g_ref[i]
        beta = ln_b_ref[i]
        b1 = b1_ref[i]
        b2 = b2_ref[i]
        h = _layernorm(res, gamma, beta, true_latent)
        h = jnp.dot(h.astype(jnp.bfloat16), w1_ref[i],
                    preferred_element_type=jnp.float32) + b1
        h = jnp.maximum(h, 0.0)  # ReLU
        h = jnp.dot(h.astype(jnp.bfloat16), w2_ref[i],
                    preferred_element_type=jnp.float32) + b2
        out = h + res

    # output head: LayerNorm -> Linear(latent -> out_size) [-> Tanh]
    out = _layernorm(out, og_ref[...], ob_ref[...], true_latent)
    out = jnp.dot(out.astype(jnp.bfloat16), w_out_ref[...],
                  preferred_element_type=jnp.float32) + b_out_ref[...]
    if tan_out:
        out = jnp.tanh(out)

    o_ref[...] = out.astype(o_ref.dtype)


def simba_net(x, params, *, n_layers: int, tan_out: bool = False, batch_block: int = 256):
    """Run SimBaNet forward pass in a single Pallas kernel."""
    B, in_size = x.shape
    L = params["w_in"].shape[1]
    H = params["w1"].shape[2]          # 4 * latent
    out_size = params["w_out"].shape[1]

    # --- lane padding (wrapper-side layout plumbing; math unaffected) ---
    in_p = _round_up(in_size, LANE)
    L_p = _round_up(L, LANE)
    H_p = _round_up(H, LANE)
    out_p = _round_up(out_size, LANE)

    bb = batch_block if B >= batch_block else _round_up(B, SUBLANE)
    B_p = _round_up(B, bb)

    wdt = jnp.bfloat16
    x_p = _pad_to(x.astype(jnp.float32), (B_p, in_p))
    w_in = _pad_to(params["w_in"], (in_p, L_p)).astype(wdt)
    b_in = _pad_to(params["b_in"], (1, L_p))
    ln_g = _pad_to(params["ln_g"], (n_layers, 1, L_p))
    ln_b = _pad_to(params["ln_b"], (n_layers, 1, L_p))
    w1 = _pad_to(params["w1"], (n_layers, L_p, H_p)).astype(wdt)
    b1 = _pad_to(params["b1"], (n_layers, 1, H_p))
    w2 = _pad_to(params["w2"], (n_layers, H_p, L_p)).astype(wdt)
    b2 = _pad_to(params["b2"], (n_layers, 1, L_p))
    og = _pad_to(params["og"], (1, L_p))
    ob = _pad_to(params["ob"], (1, L_p))
    w_out = _pad_to(params["w_out"], (L_p, out_p)).astype(wdt)
    b_out = _pad_to(params["b_out"], (1, out_p))

    weights = (w_in, b_in, ln_g, ln_b, w1, b1, w2, b2, og, ob, w_out, b_out)

    # --- VMEM budget: only raise the scoped limit if actually needed ---
    resident_bytes = sum(int(a.size) * a.dtype.itemsize for a in weights)
    pipeline_bytes = 2 * bb * (in_p + out_p) * 4          # double-buffered x / o tiles
    work_bytes = 4 * bb * max(L_p, H_p) * 4               # activation temporaries headroom
    needed = resident_bytes + pipeline_bytes + work_bytes + (2 << 20)
    vmem_limit = int(needed) if needed > (32 << 20) else None

    # --- advisory cost estimate for the surrounding XLA schedule ---
    flops = 2 * B_p * (in_p * L_p + n_layers * 2 * L_p * H_p + L_p * out_p)
    transcendentals = B_p * (n_layers + 1) + (B_p * out_p if tan_out else 0)
    bytes_accessed = int(x_p.size) * 4 + resident_bytes + B_p * out_p * 4
    cost = pl.CostEstimate(flops=int(flops),
                           transcendentals=int(transcendentals),
                           bytes_accessed=int(bytes_accessed))

    kernel = functools.partial(simba_kernel, n_layers=n_layers, tan_out=tan_out,
                               true_latent=L)

    x_spec = pl.BlockSpec((bb, in_p), lambda b: (b, 0))
    o_spec = pl.BlockSpec((bb, out_p), lambda b: (b, 0))
    # Weight/bias arrays: whole array resident in VMEM, no blocking / index_map.
    w_specs = [pl.BlockSpec(memory_space=pltpu.MemorySpace.VMEM) for _ in weights]

    out_p_arr = pl.pallas_call(
        kernel,
        out_shape=jax.ShapeDtypeStruct((B_p, out_p), jnp.float32),
        grid=(B_p // bb,),
        in_specs=[x_spec] + w_specs,
        out_specs=o_spec,
        compiler_params=pltpu.CompilerParams(
            dimension_semantics=("parallel",),
            vmem_limit_bytes=vmem_limit,
        ),
        cost_estimate=cost,
    )(x_p, *weights)

    return out_p_arr[:B, :out_size]


def init_params(key, n, in_size, latent_size, out_size):
    """Deterministic synthetic He-style init (shapes match the PyTorch module)."""
    ks = jax.random.split(key, 6 + 4 * n)
    kit = iter(ks)

    def he(k, fan_in, shape):
        return (jax.random.normal(k, shape, jnp.float32)
                * jnp.sqrt(2.0 / fan_in)).astype(jnp.float32)

    L = latent_size
    params = {
        "w_in": he(next(kit), in_size, (in_size, L)),
        "b_in": jnp.zeros((1, L), jnp.float32),
        # per-layer stacks
        "ln_g": jnp.ones((n, 1, L), jnp.float32),
        "ln_b": jnp.zeros((n, 1, L), jnp.float32),
        "w1": jnp.stack([he(next(kit), L, (L, 4 * L)) for _ in range(n)]),
        "b1": jnp.zeros((n, 1, 4 * L), jnp.float32),
        "w2": jnp.stack([he(next(kit), 4 * L, (4 * L, L)) for _ in range(n)]),
        "b2": jnp.zeros((n, 1, L), jnp.float32),
        # output head
        "og": jnp.ones((1, L), jnp.float32),
        "ob": jnp.zeros((1, L), jnp.float32),
        "w_out": he(next(kit), L, (L, out_size)),
        "b_out": jnp.zeros((1, out_size), jnp.float32),
    }
    for _ in kit:   # consume remaining keys for determinism regardless of n
        pass
    return params


def simba_net_ref(x, params, *, n_layers: int, tan_out: bool = False,
                  matmul_dtype=jnp.float32):
    """Pure-JAX reference. matmul_dtype=bf16 emulates the kernel's precision."""
    L = params["w_in"].shape[1]

    def mm(a, w):
        return jnp.dot(a.astype(matmul_dtype), w.astype(matmul_dtype),
                       preferred_element_type=jnp.float32)

    out = mm(x, params["w_in"]) + params["b_in"]
    for i in range(n_layers):
        res = out
        h = _layernorm(res, params["ln_g"][i], params["ln_b"][i], L)
        h = jnp.maximum(mm(h, params["w1"][i]) + params["b1"][i], 0.0)
        h = mm(h, params["w2"][i]) + params["b2"][i]
        out = h + res
    out = _layernorm(out, params["og"], params["ob"], L)
    out = mm(out, params["w_out"]) + params["b_out"]
    if tan_out:
        out = jnp.tanh(out)
    return out


if __name__ == "__main__":
    # Small shapes consistent with the module's forward.
    B, N_LAYERS, IN_SIZE, LATENT, OUT_SIZE = 8, 2, 16, 32, 8
    TAN_OUT = False

    key = jax.random.PRNGKey(0)
    kx, kp = jax.random.split(key)
    x = jax.random.normal(kx, (B, IN_SIZE), jnp.float32)
    params = init_params(kp, N_LAYERS, IN_SIZE, LATENT, OUT_SIZE)

    out = simba_net(x, params, n_layers=N_LAYERS, tan_out=TAN_OUT)
    out = jax.block_until_ready(out)
    assert out.shape == (B, OUT_SIZE)

    # Precision-matched reference (bf16 matmul operands, f32 accumulation).
    ref_bf16 = simba_net_ref(x, params, n_layers=N_LAYERS, tan_out=TAN_OUT,
                             matmul_dtype=jnp.bfloat16)
    assert jnp.allclose(out, ref_bf16, atol=2e-3, rtol=2e-3), \
        "mismatch vs precision-matched JAX reference"

    # Full-f32 semantic reference (PyTorch module semantics); loose tolerance
    # accounts only for bf16 weight/activation rounding in the matmuls.
    ref_f32 = simba_net_ref(x, params, n_layers=N_LAYERS, tan_out=TAN_OUT)
    assert jnp.allclose(out, ref_f32, atol=5e-2, rtol=5e-2), \
        "mismatch vs f32 JAX reference"

    print("KERNEL_OK")
</pallas_src>

<mosaic_0001>
module attributes {stable_mosaic.version = 11 : i64} {
  func.func @simba_kernel(%arg0: i32, %arg1: memref<8x128xf32, #tpu.memory_space<vmem>>, %arg2: memref<128x128xbf16, #tpu.memory_space<vmem>>, %arg3: memref<1x128xf32, #tpu.memory_space<vmem>>, %arg4: memref<2x1x128xf32, #tpu.memory_space<vmem>>, %arg5: memref<2x1x128xf32, #tpu.memory_space<vmem>>, %arg6: memref<2x128x128xbf16, #tpu.memory_space<vmem>>, %arg7: memref<2x1x128xf32, #tpu.memory_space<vmem>>, %arg8: memref<2x128x128xbf16, #tpu.memory_space<vmem>>, %arg9: memref<2x1x128xf32, #tpu.memory_space<vmem>>, %arg10: memref<1x128xf32, #tpu.memory_space<vmem>>, %arg11: memref<1x128xf32, #tpu.memory_space<vmem>>, %arg12: memref<128x128xbf16, #tpu.memory_space<vmem>>, %arg13: memref<1x128xf32, #tpu.memory_space<vmem>>, %arg14: memref<8x128xf32, #tpu.memory_space<vmem>>) attributes {dimension_semantics = [#tpu.dimension_semantics<parallel>], iteration_bounds = array<i64: 1>, scalar_prefetch = 0 : i64, scratch_operands = 0 : i64, tpu.core_type = #tpu.core_type<tc>, window_params = [{transform_indices = @transform_0, window_bounds = array<i64: 8, 128>}, {pipeline_mode = #tpu.pipeline_mode<synchronous>, transform_indices = @transform_1, window_bounds = array<i64: 128, 128>}, {pipeline_mode = #tpu.pipeline_mode<synchronous>, transform_indices = @transform_2, window_bounds = array<i64: 1, 128>}, {pipeline_mode = #tpu.pipeline_mode<synchronous>, transform_indices = @transform_3, window_bounds = array<i64: 2, 1, 128>}, {pipeline_mode = #tpu.pipeline_mode<synchronous>, transform_indices = @transform_4, window_bounds = array<i64: 2, 1, 128>}, {pipeline_mode = #tpu.pipeline_mode<synchronous>, transform_indices = @transform_5, window_bounds = array<i64: 2, 128, 128>}, {pipeline_mode = #tpu.pipeline_mode<synchronous>, transform_indices = @transform_6, window_bounds = array<i64: 2, 1, 128>}, {pipeline_mode = #tpu.pipeline_mode<synchronous>, transform_indices = @transform_7, window_bounds = array<i64: 2, 128, 128>}, {pipeline_mode = #tpu.pipeline_mode<synchronous>, transform_indices = @transform_8, window_bounds = array<i64: 2, 1, 128>}, {pipeline_mode = #tpu.pipeline_mode<synchronous>, transform_indices = @transform_9, window_bounds = array<i64: 1, 128>}, {pipeline_mode = #tpu.pipeline_mode<synchronous>, transform_indices = @transform_10, window_bounds = array<i64: 1, 128>}, {pipeline_mode = #tpu.pipeline_mode<synchronous>, transform_indices = @transform_11, window_bounds = array<i64: 128, 128>}, {pipeline_mode = #tpu.pipeline_mode<synchronous>, transform_indices = @transform_12, window_bounds = array<i64: 1, 128>}, {transform_indices = @transform_13, window_bounds = array<i64: 8, 128>}]} {
    %c0 = arith.constant 0 : index
    %c0_0 = arith.constant 0 : index
    %0 = vector.load %arg1[%c0, %c0_0] : memref<8x128xf32, #tpu.memory_space<vmem>>, vector<8x128xf32>
    %1 = arith.truncf %0 : vector<8x128xf32> to vector<8x128xbf16>
    %c0_1 = arith.constant 0 : index
    %c0_2 = arith.constant 0 : index
    %2 = vector.load %arg2[%c0_1, %c0_2] : memref<128x128xbf16, #tpu.memory_space<vmem>>, vector<128x128xbf16>
    %cst = arith.constant dense<0.000000e+00> : vector<8x128xf32>
    %3 = tpu.matmul %1, %2, %cst {dimension_numbers = #tpu.dot_dimension_numbers<[1], [0], [0], [1], [0, 0, 1, 1], [], []>} : vector<8x128xbf16>, vector<128x128xbf16>, vector<8x128xf32> -> vector<8x128xf32>
    %c0_3 = arith.constant 0 : index
    %c0_4 = arith.constant 0 : index
    %4 = vector.load %arg3[%c0_3, %c0_4] : memref<1x128xf32, #tpu.memory_space<vmem>>, vector<1x128xf32>
    %5 = vector.broadcast %4 : vector<1x128xf32> to vector<8x128xf32>
    %6 = arith.addf %3, %5 : vector<8x128xf32>
    %c0_5 = arith.constant 0 : index
    %c0_6 = arith.constant 0 : index
    %c0_7 = arith.constant 0 : index
    %7 = vector.load %arg4[%c0_5, %c0_6, %c0_7] : memref<2x1x128xf32, #tpu.memory_space<vmem>>, vector<1x1x128xf32>
    %8 = vector.shape_cast %7 : vector<1x1x128xf32> to vector<1x128xf32>
    %c0_8 = arith.constant 0 : index
    %c0_9 = arith.constant 0 : index
    %c0_10 = arith.constant 0 : index
    %9 = vector.load %arg5[%c0_8, %c0_9, %c0_10] : memref<2x1x128xf32, #tpu.memory_space<vmem>>, vector<1x1x128xf32>
    %10 = vector.shape_cast %9 : vector<1x1x128xf32> to vector<1x128xf32>
    %c0_11 = arith.constant 0 : index
    %c0_12 = arith.constant 0 : index
    %c0_13 = arith.constant 0 : index
    %11 = vector.load %arg7[%c0_11, %c0_12, %c0_13] : memref<2x1x128xf32, #tpu.memory_space<vmem>>, vector<1x1x128xf32>
    %12 = vector.shape_cast %11 : vector<1x1x128xf32> to vector<1x128xf32>
    %c0_14 = arith.constant 0 : index
    %c0_15 = arith.constant 0 : index
    %c0_16 = arith.constant 0 : index
    %13 = vector.load %arg9[%c0_14, %c0_15, %c0_16] : memref<2x1x128xf32, #tpu.memory_space<vmem>>, vector<1x1x128xf32>
    %14 = vector.shape_cast %13 : vector<1x1x128xf32> to vector<1x128xf32>
    %cst_17 = arith.constant dense<0.000000e+00> : vector<8xf32>
    %15 = vector.multi_reduction <add>, %6, %cst_17 [1] : vector<8x128xf32> to vector<8xf32>
    %16 = vector.shape_cast %15 : vector<8xf32> to vector<8x1xf32>
    %17 = arith.mulf %6, %6 : vector<8x128xf32>
    %cst_18 = arith.constant dense<0.000000e+00> : vector<8xf32>
    %18 = vector.multi_reduction <add>, %17, %cst_18 [1] : vector<8x128xf32> to vector<8xf32>
    %19 = vector.shape_cast %18 : vector<8xf32> to vector<8x1xf32>
    %cst_19 = arith.constant 3.125000e-02 : f32
    %20 = vector.broadcast %cst_19 : f32 to vector<8x1xf32>
    %21 = arith.mulf %16, %20 : vector<8x1xf32>
    %cst_20 = arith.constant 3.125000e-02 : f32
    %22 = vector.broadcast %cst_20 : f32 to vector<8x1xf32>
    %23 = arith.mulf %19, %22 : vector<8x1xf32>
    %24 = arith.mulf %21, %21 : vector<8x1xf32>
    %25 = arith.subf %23, %24 : vector<8x1xf32>
    %cst_21 = arith.constant 0.000000e+00 : f32
    %26 = vector.broadcast %cst_21 : f32 to vector<8x1xf32>
    %27 = arith.maximumf %25, %26 : vector<8x1xf32>
    %28 = vector.broadcast %21 : vector<8x1xf32> to vector<8x128xf32>
    %29 = arith.subf %6, %28 : vector<8x128xf32>
    %cst_22 = arith.constant 9.99999974E-6 : f32
    %30 = vector.broadcast %cst_22 : f32 to vector<8x1xf32>
    %31 = arith.addf %27, %30 : vector<8x1xf32>
    %32 = math.rsqrt %31 : vector<8x1xf32>
    %33 = vector.broadcast %32 : vector<8x1xf32> to vector<8x128xf32>
    %34 = arith.mulf %29, %33 : vector<8x128xf32>
    %35 = vector.broadcast %8 : vector<1x128xf32> to vector<8x128xf32>
    %36 = arith.mulf %34, %35 : vector<8x128xf32>
    %37 = vector.broadcast %10 : vector<1x128xf32> to vector<8x128xf32>
    %38 = arith.addf %36, %37 : vector<8x128xf32>
    %39 = arith.truncf %38 : vector<8x128xf32> to vector<8x128xbf16>
    %c0_23 = arith.constant 0 : index
    %c0_24 = arith.constant 0 : index
    %c0_25 = arith.constant 0 : index
    %40 = vector.load %arg6[%c0_23, %c0_24, %c0_25] : memref<2x128x128xbf16, #tpu.memory_space<vmem>>, vector<1x128x128xbf16>
    %41 = vector.shape_cast %40 : vector<1x128x128xbf16> to vector<128x128xbf16>
    %cst_26 = arith.constant dense<0.000000e+00> : vector<8x128xf32>
    %42 = tpu.matmul %39, %41, %cst_26 {dimension_numbers = #tpu.dot_dimension_numbers<[1], [0], [0], [1], [0, 0, 1, 1], [], []>} : vector<8x128xbf16>, vector<128x128xbf16>, vector<8x128xf32> -> vector<8x128xf32>
    %43 = vector.broadcast %12 : vector<1x128xf32> to vector<8x128xf32>
    %44 = arith.addf %42, %43 : vector<8x128xf32>
    %cst_27 = arith.constant 0.000000e+00 : f32
    %45 = vector.broadcast %cst_27 : f32 to vector<8x128xf32>
    %46 = arith.maximumf %44, %45 : vector<8x128xf32>
    %47 = arith.truncf %46 : vector<8x128xf32> to vector<8x128xbf16>
    %c0_28 = arith.constant 0 : index
    %c0_29 = arith.constant 0 : index
    %c0_30 = arith.constant 0 : index
    %48 = vector.load %arg8[%c0_28, %c0_29, %c0_30] : memref<2x128x128xbf16, #tpu.memory_space<vmem>>, vector<1x128x128xbf16>
    %49 = vector.shape_cast %48 : vector<1x128x128xbf16> to vector<128x128xbf16>
    %cst_31 = arith.constant dense<0.000000e+00> : vector<8x128xf32>
    %50 = tpu.matmul %47, %49, %cst_31 {dimension_numbers = #tpu.dot_dimension_numbers<[1], [0], [0], [1], [0, 0, 1, 1], [], []>} : vector<8x128xbf16>, vector<128x128xbf16>, vector<8x128xf32> -> vector<8x128xf32>
    %51 = vector.broadcast %14 : vector<1x128xf32> to vector<8x128xf32>
    %52 = arith.addf %50, %51 : vector<8x128xf32>
    %53 = arith.addf %52, %6 : vector<8x128xf32>
    %c1 = arith.constant 1 : index
    %c0_32 = arith.constant 0 : index
    %c0_33 = arith.constant 0 : index
    %54 = vector.load %arg4[%c1, %c0_32, %c0_33] : memref<2x1x128xf32, #tpu.memory_space<vmem>>, vector<1x1x128xf32>
    %55 = vector.shape_cast %54 : vector<1x1x128xf32> to vector<1x128xf32>
    %c1_34 = arith.constant 1 : index
    %c0_35 = arith.constant 0 : index
    %c0_36 = arith.constant 0 : index
    %56 = vector.load %arg5[%c1_34, %c0_35, %c0_36] : memref<2x1x128xf32, #tpu.memory_space<vmem>>, vector<1x1x128xf32>
    %57 = vector.shape_cast %56 : vector<1x1x128xf32> to vector<1x128xf32>
    %c1_37 = arith.constant 1 : index
    %c0_38 = arith.constant 0 : index
    %c0_39 = arith.constant 0 : index
    %58 = vector.load %arg7[%c1_37, %c0_38, %c0_39] : memref<2x1x128xf32, #tpu.memory_space<vmem>>, vector<1x1x128xf32>
    %59 = vector.shape_cast %58 : vector<1x1x128xf32> to vector<1x128xf32>
    %c1_40 = arith.constant 1 : index
    %c0_41 = arith.constant 0 : index
    %c0_42 = arith.constant 0 : index
    %60 = vector.load %arg9[%c1_40, %c0_41, %c0_42] : memref<2x1x128xf32, #tpu.memory_space<vmem>>, vector<1x1x128xf32>
    %61 = vector.shape_cast %60 : vector<1x1x128xf32> to vector<1x128xf32>
    %cst_43 = arith.constant dense<0.000000e+00> : vector<8xf32>
    %62 = vector.multi_reduction <add>, %53, %cst_43 [1] : vector<8x128xf32> to vector<8xf32>
    %63 = vector.shape_cast %62 : vector<8xf32> to vector<8x1xf32>
    %64 = arith.mulf %53, %53 : vector<8x128xf32>
    %cst_44 = arith.constant dense<0.000000e+00> : vector<8xf32>
    %65 = vector.multi_reduction <add>, %64, %cst_44 [1] : vector<8x128xf32> to vector<8xf32>
    %66 = vector.shape_cast %65 : vector<8xf32> to vector<8x1xf32>
    %cst_45 = arith.constant 3.125000e-02 : f32
    %67 = vector.broadcast %cst_45 : f32 to vector<8x1xf32>
    %68 = arith.mulf %63, %67 : vector<8x1xf32>
    %cst_46 = arith.constant 3.125000e-02 : f32
    %69 = vector.broadcast %cst_46 : f32 to vector<8x1xf32>
    %70 = arith.mulf %66, %69 : vector<8x1xf32>
    %71 = arith.mulf %68, %68 : vector<8x1xf32>
    %72 = arith.subf %70, %71 : vector<8x1xf32>
    %cst_47 = arith.constant 0.000000e+00 : f32
    %73 = vector.broadcast %cst_47 : f32 to vector<8x1xf32>
    %74 = arith.maximumf %72, %73 : vector<8x1xf32>
    %75 = vector.broadcast %68 : vector<8x1xf32> to vector<8x128xf32>
    %76 = arith.subf %53, %75 : vector<8x128xf32>
    %cst_48 = arith.constant 9.99999974E-6 : f32
    %77 = vector.broadcast %cst_48 : f32 to vector<8x1xf32>
    %78 = arith.addf %74, %77 : vector<8x1xf32>
    %79 = math.rsqrt %78 : vector<8x1xf32>
    %80 = vector.broadcast %79 : vector<8x1xf32> to vector<8x128xf32>
    %81 = arith.mulf %76, %80 : vector<8x128xf32>
    %82 = vector.broadcast %55 : vector<1x128xf32> to vector<8x128xf32>
    %83 = arith.mulf %81, %82 : vector<8x128xf32>
    %84 = vector.broadcast %57 : vector<1x128xf32> to vector<8x128xf32>
    %85 = arith.addf %83, %84 : vector<8x128xf32>
    %86 = arith.truncf %85 : vector<8x128xf32> to vector<8x128xbf16>
    %c1_49 = arith.constant 1 : index
    %c0_50 = arith.constant 0 : index
    %c0_51 = arith.constant 0 : index
    %87 = vector.load %arg6[%c1_49, %c0_50, %c0_51] : memref<2x128x128xbf16, #tpu.memory_space<vmem>>, vector<1x128x128xbf16>
    %88 = vector.shape_cast %87 : vector<1x128x128xbf16> to vector<128x128xbf16>
    %cst_52 = arith.constant dense<0.000000e+00> : vector<8x128xf32>
    %89 = tpu.matmul %86, %88, %cst_52 {dimension_numbers = #tpu.dot_dimension_numbers<[1], [0], [0], [1], [0, 0, 1, 1], [], []>} : vector<8x128xbf16>, vector<128x128xbf16>, vector<8x128xf32> -> vector<8x128xf32>
    %90 = vector.broadcast %59 : vector<1x128xf32> to vector<8x128xf32>
    %91 = arith.addf %89, %90 : vector<8x128xf32>
    %cst_53 = arith.constant 0.000000e+00 : f32
    %92 = vector.broadcast %cst_53 : f32 to vector<8x128xf32>
    %93 = arith.maximumf %91, %92 : vector<8x128xf32>
    %94 = arith.truncf %93 : vector<8x128xf32> to vector<8x128xbf16>
    %c1_54 = arith.constant 1 : index
    %c0_55 = arith.constant 0 : index
    %c0_56 = arith.constant 0 : index
    %95 = vector.load %arg8[%c1_54, %c0_55, %c0_56] : memref<2x128x128xbf16, #tpu.memory_space<vmem>>, vector<1x128x128xbf16>
    %96 = vector.shape_cast %95 : vector<1x128x128xbf16> to vector<128x128xbf16>
    %cst_57 = arith.constant dense<0.000000e+00> : vector<8x128xf32>
    %97 = tpu.matmul %94, %96, %cst_57 {dimension_numbers = #tpu.dot_dimension_numbers<[1], [0], [0], [1], [0, 0, 1, 1], [], []>} : vector<8x128xbf16>, vector<128x128xbf16>, vector<8x128xf32> -> vector<8x128xf32>
    %98 = vector.broadcast %61 : vector<1x128xf32> to vector<8x128xf32>
    %99 = arith.addf %97, %98 : vector<8x128xf32>
    %100 = arith.addf %99, %53 : vector<8x128xf32>
    %c0_58 = arith.constant 0 : index
    %c0_59 = arith.constant 0 : index
    %101 = vector.load %arg10[%c0_58, %c0_59] : memref<1x128xf32, #tpu.memory_space<vmem>>, vector<1x128xf32>
    %c0_60 = arith.constant 0 : index
    %c0_61 = arith.constant 0 : index
    %102 = vector.load %arg11[%c0_60, %c0_61] : memref<1x128xf32, #tpu.memory_space<vmem>>, vector<1x128xf32>
    %cst_62 = arith.constant dense<0.000000e+00> : vector<8xf32>
    %103 = vector.multi_reduction <add>, %100, %cst_62 [1] : vector<8x128xf32> to vector<8xf32>
    %104 = vector.shape_cast %103 : vector<8xf32> to vector<8x1xf32>
    %105 = arith.mulf %100, %100 : vector<8x128xf32>
    %cst_63 = arith.constant dense<0.000000e+00> : vector<8xf32>
    %106 = vector.multi_reduction <add>, %105, %cst_63 [1] : vector<8x128xf32> to vector<8xf32>
    %107 = vector.shape_cast %106 : vector<8xf32> to vector<8x1xf32>
    %cst_64 = arith.constant 3.125000e-02 : f32
    %108 = vector.broadcast %cst_64 : f32 to vector<8x1xf32>
    %109 = arith.mulf %104, %108 : vector<8x1xf32>
    %cst_65 = arith.constant 3.125000e-02 : f32
    %110 = vector.broadcast %cst_65 : f32 to vector<8x1xf32>
    %111 = arith.mulf %107, %110 : vector<8x1xf32>
    %112 = arith.mulf %109, %109 : vector<8x1xf32>
    %113 = arith.subf %111, %112 : vector<8x1xf32>
    %cst_66 = arith.constant 0.000000e+00 : f32
    %114 = vector.broadcast %cst_66 : f32 to vector<8x1xf32>
    %115 = arith.maximumf %113, %114 : vector<8x1xf32>
    %116 = vector.broadcast %109 : vector<8x1xf32> to vector<8x128xf32>
    %117 = arith.subf %100, %116 : vector<8x128xf32>
    %cst_67 = arith.constant 9.99999974E-6 : f32
    %118 = vector.broadcast %cst_67 : f32 to vector<8x1xf32>
    %119 = arith.addf %115, %118 : vector<8x1xf32>
    %120 = math.rsqrt %119 : vector<8x1xf32>
    %121 = vector.broadcast %120 : vector<8x1xf32> to vector<8x128xf32>
    %122 = arith.mulf %117, %121 : vector<8x128xf32>
    %123 = vector.broadcast %101 : vector<1x128xf32> to vector<8x128xf32>
    %124 = arith.mulf %122, %123 : vector<8x128xf32>
    %125 = vector.broadcast %102 : vector<1x128xf32> to vector<8x128xf32>
    %126 = arith.addf %124, %125 : vector<8x128xf32>
    %127 = arith.truncf %126 : vector<8x128xf32> to vector<8x128xbf16>
    %c0_68 = arith.constant 0 : index
    %c0_69 = arith.constant 0 : index
    %128 = vector.load %arg12[%c0_68, %c0_69] : memref<128x128xbf16, #tpu.memory_space<vmem>>, vector<128x128xbf16>
    %cst_70 = arith.constant dense<0.000000e+00> : vector<8x128xf32>
    %129 = tpu.matmul %127, %128, %cst_70 {dimension_numbers = #tpu.dot_dimension_numbers<[1], [0], [0], [1], [0, 0, 1, 1], [], []>} : vector<8x128xbf16>, vector<128x128xbf16>, vector<8x128xf32> -> vector<8x128xf32>
    %c0_71 = arith.constant 0 : index
    %c0_72 = arith.constant 0 : index
    %130 = vector.load %arg13[%c0_71, %c0_72] : memref<1x128xf32, #tpu.memory_space<vmem>>, vector<1x128xf32>
    %131 = vector.broadcast %130 : vector<1x128xf32> to vector<8x128xf32>
    %132 = arith.addf %129, %131 : vector<8x128xf32>
    %c0_73 = arith.constant 0 : index
    %c0_74 = arith.constant 0 : index
    %133 = vector.load %arg14[%c0_73, %c0_74] : memref<8x128xf32, #tpu.memory_space<vmem>>, vector<8x128xf32>
    tpu.vector_store %arg14[%c0_73, %c0_74], %132 {strides = array<i32>} : memref<8x128xf32, #tpu.memory_space<vmem>>, vector<8x128xf32>,
    return
  }
  func.func @transform_0(%arg0: i32) -> (i32, i32) {
    %c0_i32 = arith.constant 0 : i32
    %c0_i32_0 = arith.constant 0 : i32
    return %arg0, %c0_i32 : i32, i32
  }
  func.func @transform_1(%arg0: i32) -> (i32, i32) {
    %c0_i32 = arith.constant 0 : i32
    %c0_i32_0 = arith.constant 0 : i32
    %c0_i32_1 = arith.constant 0 : i32
    return %c0_i32, %c0_i32_0 : i32, i32
  }
  func.func @transform_2(%arg0: i32) -> (i32, i32) {
    %c0_i32 = arith.constant 0 : i32
    %c0_i32_0 = arith.constant 0 : i32
    %c0_i32_1 = arith.constant 0 : i32
    return %c0_i32, %c0_i32_0 : i32, i32
  }
  func.func @transform_3(%arg0: i32) -> (i32, i32, i32) {
    %c0_i32 = arith.constant 0 : i32
    %c0_i32_0 = arith.constant 0 : i32
    %c0_i32_1 = arith.constant 0 : i32
    %c0_i32_2 = arith.constant 0 : i32
    return %c0_i32, %c0_i32_0, %c0_i32_1 : i32, i32, i32
  }
  func.func @transform_4(%arg0: i32) -> (i32, i32, i32) {
    %c0_i32 = arith.constant 0 : i32
    %c0_i32_0 = arith.constant 0 : i32
    %c0_i32_1 = arith.constant 0 : i32
    %c0_i32_2 = arith.constant 0 : i32
    return %c0_i32, %c0_i32_0, %c0_i32_1 : i32, i32, i32
  }
  func.func @transform_5(%arg0: i32) -> (i32, i32, i32) {
    %c0_i32 = arith.constant 0 : i32
    %c0_i32_0 = arith.constant 0 : i32
    %c0_i32_1 = arith.constant 0 : i32
    %c0_i32_2 = arith.constant 0 : i32
    return %c0_i32, %c0_i32_0, %c0_i32_1 : i32, i32, i32
  }
  func.func @transform_6(%arg0: i32) -> (i32, i32, i32) {
    %c0_i32 = arith.constant 0 : i32
    %c0_i32_0 = arith.constant 0 : i32
    %c0_i32_1 = arith.constant 0 : i32
    %c0_i32_2 = arith.constant 0 : i32
    return %c0_i32, %c0_i32_0, %c0_i32_1 : i32, i32, i32
  }
  func.func @transform_7(%arg0: i32) -> (i32, i32, i32) {
    %c0_i32 = arith.constant 0 : i32
    %c0_i32_0 = arith.constant 0 : i32
    %c0_i32_1 = arith.constant 0 : i32
    %c0_i32_2 = arith.constant 0 : i32
    return %c0_i32, %c0_i32_0, %c0_i32_1 : i32, i32, i32
  }
  func.func @transform_8(%arg0: i32) -> (i32, i32, i32) {
    %c0_i32 = arith.constant 0 : i32
    %c0_i32_0 = arith.constant 0 : i32
    %c0_i32_1 = arith.constant 0 : i32
    %c0_i32_2 = arith.constant 0 : i32
    return %c0_i32, %c0_i32_0, %c0_i32_1 : i32, i32, i32
  }
  func.func @transform_9(%arg0: i32) -> (i32, i32) {
    %c0_i32 = arith.constant 0 : i32
    %c0_i32_0 = arith.constant 0 : i32
    %c0_i32_1 = arith.constant 0 : i32
    return %c0_i32, %c0_i32_0 : i32, i32
  }
  func.func @transform_10(%arg0: i32) -> (i32, i32) {
    %c0_i32 = arith.constant 0 : i32
    %c0_i32_0 = arith.constant 0 : i32
    %c0_i32_1 = arith.constant 0 : i32
    return %c0_i32, %c0_i32_0 : i32, i32
  }
  func.func @transform_11(%arg0: i32) -> (i32, i32) {
    %c0_i32 = arith.constant 0 : i32
    %c0_i32_0 = arith.constant 0 : i32
    %c0_i32_1 = arith.constant 0 : i32
    return %c0_i32, %c0_i32_0 : i32, i32
  }
  func.func @transform_12(%arg0: i32) -> (i32, i32) {
    %c0_i32 = arith.constant 0 : i32
    %c0_i32_0 = arith.constant 0 : i32
    %c0_i32_1 = arith.constant 0 : i32
    return %c0_i32, %c0_i32_0 : i32, i32
  }
  func.func @transform_13(%arg0: i32) -> (i32, i32) {
    %c0_i32 = arith.constant 0 : i32
    %c0_i32_0 = arith.constant 0 : i32
    return %arg0, %c0_i32 : i32, i32
  }
}

</mosaic_0001>

<llo_original>
// kernel: tpu_custom_call.1
$region0: #{tpu_custom_call.1}
  #allocation0 [shape = 'u32[]', space=smem, size = 0x4, offset = 0x4, fixed_abs, tag = 'smem constant byte address 0x4 - core index']
  #allocation1 [shape = 'u32[72,128]{1,0:T(1,128)}', space=vmem, size = 0x9000, scoped, tag = 'internal scratch']
  %s0 = inlined_call_operand.hbm [shape: f32[8,128], index: 0, kind: input, shape index: {}]
  %s1 = inlined_call_operand.hbm [shape: bf16[128,128], index: 1, kind: input, shape index: {}]
  %s2 = inlined_call_operand.hbm [shape: f32[1,128], index: 2, kind: input, shape index: {}]
  %s3 = inlined_call_operand.vmem [shape: f32[2,1,128], index: 3, kind: input, shape index: {}]
  %s4 = inlined_call_operand.hbm [shape: f32[2,1,128], index: 4, kind: input, shape index: {}]
  %s5 = inlined_call_operand.hbm [shape: bf16[2,128,128], index: 5, kind: input, shape index: {}]
  %s6 = inlined_call_operand.vmem [shape: f32[2,1,128], index: 6, kind: input, shape index: {}]
  %s7 = inlined_call_operand.hbm [shape: bf16[2,128,128], index: 7, kind: input, shape index: {}]
  %s8 = inlined_call_operand.vmem [shape: f32[2,1,128], index: 8, kind: input, shape index: {}]
  %s9 = inlined_call_operand.vmem [shape: f32[1,128], index: 9, kind: input, shape index: {}]
  %s10 = inlined_call_operand.vmem [shape: f32[1,128], index: 10, kind: input, shape index: {}]
  %s11 = inlined_call_operand.hbm [shape: bf16[128,128], index: 11, kind: input, shape index: {}]
  %s12 = inlined_call_operand.vmem [shape: f32[1,128], index: 12, kind: input, shape index: {}]
  %s13 = inlined_call_operand.hbm [shape: f32[8,128], index: 13, kind: output, shape index: {}]
  %s14 = sld [smem:[#allocation0]]
  $region90: #{tpu_custom_call.1} parent=0
    _
  %s16 = ssub.s32 1, %s14
  %s17 = scalar_select 0, %s16, %s14
  $region1: #{tpu_custom_call.1} parent=0
    #allocation2 [shape = 'u8[4096]{0}', space=vmem, size = 0x1000, scoped, tag = 'input window, operand 0, single buffered']
    #allocation3 [shape = 's32[1]{0}', space=sflag, size = 0x4, scoped, tag = 'scoped memory for tpu_custom_call.1']
    #allocation4 [shape = 's32[1]{0}', space=sflag, size = 0x4, scoped, tag = 'scoped memory for tpu_custom_call.1']
    #allocation5 [shape = 'u8[32768]{0}', space=vmem, size = 0x8000, scoped, tag = 'input window, operand 1, single buffered']
    #allocation6 [shape = 's32[1]{0}', space=sflag, size = 0x4, scoped, tag = 'scoped memory for tpu_custom_call.1']
    #allocation7 [shape = 'u8[512]{0}', space=vmem, size = 0x400, scoped, tag = 'input window, operand 2, single buffered']
    #allocation8 [shape = 'u8[1024]{0}', space=vmem, size = 0x400, scoped, tag = 'input window, operand 4, single buffered']
    #allocation9 [shape = 's32[1]{0}', space=sflag, size = 0x4, scoped, tag = 'scoped memory for tpu_custom_call.1']
    #allocation10 [shape = 'u8[65536]{0}', space=vmem, size = 0x10000, scoped, tag = 'input window, operand 5, single buffered']
    #allocation11 [shape = 'u8[65536]{0}', space=vmem, size = 0x10000, scoped, tag = 'input window, operand 7, single buffered']
    #allocation12 [shape = 's32[1]{0}', space=sflag, size = 0x4, scoped, tag = 'scoped memory for tpu_custom_call.1']
    #allocation13 [shape = 'u8[32768]{0}', space=vmem, size = 0x8000, scoped, tag = 'input window, operand 11, single buffered']
    #allocation14 [shape = 'u8[4096]{0}', space=vmem, size = 0x1000, scoped, tag = 'output window, operand 0, single buffered']
    %18 = vsyncpa [#allocation3], 0
    %19 = vsyncpa [#allocation6], 0
    %20 = vsyncpa [#allocation9], 0
    %21 = vsyncpa [#allocation12], 0
    %22 = vsyncpa [#allocation4], 0
    // Predicated region
    $region2: #{tpu_custom_call.1} parent=1 // pred_check
      _
    $region3: #{tpu_custom_call.1} parent=1 // pred_check_branch
      %24 = sbr.rel (0) target = $region5
    $region4: #{tpu_custom_call.1} parent=1 // pred_region
      %26 = vsyncadd [#allocation3], 0
      %s28 = sshll.u32 %s0, 4
      %s29 = int_to_ptr.hbm [resolvable:$true] %s28
      %s30 = sshll.u32 [#allocation2], 4
      %s31 = int_to_ptr.vmem [resolvable:$true] %s30
      %33 = dma.hbm_to_vmem [thread:$0]  %s29, 128, %s31, [#allocation3]
    $region5: #{tpu_custom_call.1} parent=1 // pred_fallthru
      _
    // Predicated region
    $region6: #{tpu_custom_call.1} parent=1 // pred_check
      _
    $region7: #{tpu_custom_call.1} parent=1 // pred_check_branch
      %35 = sbr.rel (0) target = $region9
    $region8: #{tpu_custom_call.1} parent=1 // pred_region
      %37 = vsyncadd [#allocation6], 0
      %s38 = sshll.u32 %s1, 4
      %s39 = int_to_ptr.hbm [resolvable:$true] %s38
      %s40 = sshll.u32 [#allocation5], 4
      %s41 = int_to_ptr.vmem [resolvable:$true] %s40
      %46 = dma.hbm_to_vmem [thread:$0]  %s39, 1024, %s41, [#allocation6], 64, 64, 4
    $region9: #{tpu_custom_call.1} parent=1 // pred_fallthru
      _
    // Predicated region
    $region10: #{tpu_custom_call.1} parent=1 // pred_check
      _
    $region11: #{tpu_custom_call.1} parent=1 // pred_check_branch
      %48 = sbr.rel (0) target = $region13
    $region12: #{tpu_custom_call.1} parent=1 // pred_region
      %50 = vsyncadd [#allocation6], 0
      %s52 = sshll.u32 %s2, 4
      %s53 = int_to_ptr.hbm [resolvable:$true] %s52
      %s54 = sshll.u32 [#allocation7], 4
      %s55 = int_to_ptr.vmem [resolvable:$true] %s54
      %57 = dma.hbm_to_vmem [thread:$0]  %s53, 16, %s55, [#allocation6]
    $region13: #{tpu_custom_call.1} parent=1 // pred_fallthru
      _
    // Predicated region
    $region14: #{tpu_custom_call.1} parent=1 // pred_check
      _
    $region15: #{tpu_custom_call.1} parent=1 // pred_check_branch
      %59 = sbr.rel (0) target = $region17
    $region16: #{tpu_custom_call.1} parent=1 // pred_region
      _
    $region17: #{tpu_custom_call.1} parent=1 // pred_fallthru
      _
    // Predicated region
    $region18: #{tpu_custom_call.1} parent=1 // pred_check
      _
    $region19: #{tpu_custom_call.1} parent=1 // pred_check_branch
      %61 = sbr.rel (0) target = $region21
    $region20: #{tpu_custom_call.1} parent=1 // pred_region
      %63 = vsyncadd [#allocation9], 0
      %s64 = sshll.u32 %s4, 4
      %s65 = int_to_ptr.hbm [resolvable:$true] %s64
      %s66 = sshll.u32 [#allocation8], 4
      %s67 = int_to_ptr.vmem [resolvable:$true] %s66
      %72 = dma.hbm_to_vmem [thread:$0]  %s65, 32, %s67, [#allocation9], 16, 16, 1
    $region21: #{tpu_custom_call.1} parent=1 // pred_fallthru
      _
    // Predicated region
    $region22: #{tpu_custom_call.1} parent=1 // pred_check
      _
    $region23: #{tpu_custom_call.1} parent=1 // pred_check_branch
      %74 = sbr.rel (0) target = $region25
    $region24: #{tpu_custom_call.1} parent=1 // pred_region
      %76 = vsyncadd [#allocation9], 0
      %s77 = sshll.u32 %s5, 4
      %s78 = int_to_ptr.hbm [resolvable:$true] %s77
      %s79 = sshll.u32 [#allocation10], 4
      %s80 = int_to_ptr.vmem [resolvable:$true] %s79
      %85 = dma.hbm_to_vmem [thread:$0]  %s78, 2048, %s80, [#allocation9], 64, 64, 4
    $region25: #{tpu_custom_call.1} parent=1 // pred_fallthru
      _
    // Predicated region
    $region26: #{tpu_custom_call.1} parent=1 // pred_check
      _
    $region27: #{tpu_custom_call.1} parent=1 // pred_check_branch
      %87 = sbr.rel (0) target = $region29
    $region28: #{tpu_custom_call.1} parent=1 // pred_region
      _
    $region29: #{tpu_custom_call.1} parent=1 // pred_fallthru
      _
    // Predicated region
    $region30: #{tpu_custom_call.1} parent=1 // pred_check
      _
    $region31: #{tpu_custom_call.1} parent=1 // pred_check_branch
      %89 = sbr.rel (0) target = $region33
    $region32: #{tpu_custom_call.1} parent=1 // pred_region
      %91 = vsyncadd [#allocation12], 0
      %s92 = sshll.u32 %s7, 4
      %s93 = int_to_ptr.hbm [resolvable:$true] %s92
      %s94 = sshll.u32 [#allocation11], 4
      %s95 = int_to_ptr.vmem [resolvable:$true] %s94
      %100 = dma.hbm_to_vmem [thread:$0]  %s93, 2048, %s95, [#allocation12], 64, 64, 4
    $region33: #{tpu_custom_call.1} parent=1 // pred_fallthru
      _
    // Predicated region
    $region34: #{tpu_custom_call.1} parent=1 // pred_check
      _
    $region35: #{tpu_custom_call.1} parent=1 // pred_check_branch
      %102 = sbr.rel (0) target = $region37
    $region36: #{tpu_custom_call.1} parent=1 // pred_region
      _
    $region37: #{tpu_custom_call.1} parent=1 // pred_fallthru
      _
    // Predicated region
    $region38: #{tpu_custom_call.1} parent=1 // pred_check
      _
    $region39: #{tpu_custom_call.1} parent=1 // pred_check_branch
      %104 = sbr.rel (0) target = $region41
    $region40: #{tpu_custom_call.1} parent=1 // pred_region
      _
    $region41: #{tpu_custom_call.1} parent=1 // pred_fallthru
      _
    // Predicated region
    $region42: #{tpu_custom_call.1} parent=1 // pred_check
      _
    $region43: #{tpu_custom_call.1} parent=1 // pred_check_branch
      %106 = sbr.rel (0) target = $region45
    $region44: #{tpu_custom_call.1} parent=1 // pred_region
      _
    $region45: #{tpu_custom_call.1} parent=1 // pred_fallthru
      _
    // Predicated region
    $region46: #{tpu_custom_call.1} parent=1 // pred_check
      _
    $region47: #{tpu_custom_call.1} parent=1 // pred_check_branch
      %108 = sbr.rel (0) target = $region49
    $region48: #{tpu_custom_call.1} parent=1 // pred_region
      %110 = vsyncadd [#allocation12], 0
      %s111 = sshll.u32 %s11, 4
      %s112 = int_to_ptr.hbm [resolvable:$true] %s111
      %s113 = sshll.u32 [#allocation13], 4
      %s114 = int_to_ptr.vmem [resolvable:$true] %s113
      %119 = dma.hbm_to_vmem [thread:$0]  %s112, 1024, %s114, [#allocation12], 64, 64, 4
    $region49: #{tpu_custom_call.1} parent=1 // pred_fallthru
      _
    // Predicated region
    $region50: #{tpu_custom_call.1} parent=1 // pred_check
      _
    $region51: #{tpu_custom_call.1} parent=1 // pred_check_branch
      %121 = sbr.rel (0) target = $region53
    $region52: #{tpu_custom_call.1} parent=1 // pred_region
      _
    $region53: #{tpu_custom_call.1} parent=1 // pred_fallthru
      _
    // Predicated region
    $region54: #{tpu_custom_call.1} parent=1 // pred_check
      _
    $region55: #{tpu_custom_call.1} parent=1 // pred_check_branch
      %123 = sbr.rel (0) target = $region57
    $region56: #{tpu_custom_call.1} parent=1 // pred_region
      %125 = dma.done [#allocation3], 128
    $region57: #{tpu_custom_call.1} parent=1 // pred_fallthru
      _
    // Predicated region
    $region58: #{tpu_custom_call.1} parent=1 // pred_check
      _
    $region59: #{tpu_custom_call.1} parent=1 // pred_check_branch
      %127 = sbr.rel (0) target = $region61
    $region60: #{tpu_custom_call.1} parent=1 // pred_region
      %129 = dma.done [#allocation6], 1024
    $region61: #{tpu_custom_call.1} parent=1 // pred_fallthru
      _
    // Predicated region
    $region62: #{tpu_custom_call.1} parent=1 // pred_check
      _
    $region63: #{tpu_custom_call.1} parent=1 // pred_check_branch
      %131 = sbr.rel (0) target = $region65
    $region64: #{tpu_custom_call.1} parent=1 // pred_region
      %133 = dma.done [#allocation6], 16
    $region65: #{tpu_custom_call.1} parent=1 // pred_fallthru
      _
    // Predicated region
    $region66: #{tpu_custom_call.1} parent=1 // pred_check
      _
    $region67: #{tpu_custom_call.1} parent=1 // pred_check_branch
      %135 = sbr.rel (0) target = $region69
    $region68: #{tpu_custom_call.1} parent=1 // pred_region
      %137 = dma.done [#allocation9], 32
    $region69: #{tpu_custom_call.1} parent=1 // pred_fallthru
      _
    // Predicated region
    $region70: #{tpu_custom_call.1} parent=1 // pred_check
      _
    $region71: #{tpu_custom_call.1} parent=1 // pred_check_branch
      %139 = sbr.rel (0) target = $region73
    $region72: #{tpu_custom_call.1} parent=1 // pred_region
      %141 = dma.done [#allocation9], 2048
    $region73: #{tpu_custom_call.1} parent=1 // pred_fallthru
      _
    // Predicated region
    $region74: #{tpu_custom_call.1} parent=1 // pred_check
      _
    $region75: #{tpu_custom_call.1} parent=1 // pred_check_branch
      %143 = sbr.rel (0) target = $region77
    $region76: #{tpu_custom_call.1} parent=1 // pred_region
      %145 = dma.done [#allocation12], 2048
    $region77: #{tpu_custom_call.1} parent=1 // pred_fallthru
      _
    // Predicated region
    $region78: #{tpu_custom_call.1} parent=1 // pred_check
      _
    $region79: #{tpu_custom_call.1} parent=1 // pred_check_branch
      %147 = sbr.rel (0) target = $region81
    $region80: #{tpu_custom_call.1} parent=1 // pred_region
      %149 = dma.done [#allocation12], 1024
    $region81: #{tpu_custom_call.1} parent=1 // pred_fallthru
      _
    %v150 = vld [vmem:[#allocation2] sm:$0xff]
    %v151 = vpack.c.bf16 %v150, %v150
    %v152 = vld [vmem:[#allocation5] sm:$0xf]
    %v153 = vld [vmem:[#allocation5 + $0x4] sm:$0xf]
    %v154 = vld [vmem:[#allocation5 + $0x8] sm:$0xf]
    %v155 = vld [vmem:[#allocation5 + $0xc] sm:$0xf]
    %v156 = vld [vmem:[#allocation5 + $0x10] sm:$0xf]
    %v157 = vld [vmem:[#allocation5 + $0x14] sm:$0xf]
    %v158 = vld [vmem:[#allocation5 + $0x18] sm:$0xf]
    %v159 = vld [vmem:[#allocation5 + $0x1c] sm:$0xf]
    %v160 = vld [vmem:[#allocation5 + $0x20] sm:$0xf]
    %v161 = vld [vmem:[#allocation5 + $0x24] sm:$0xf]
    %v162 = vld [vmem:[#allocation5 + $0x28] sm:$0xf]
    %v163 = vld [vmem:[#allocation5 + $0x2c] sm:$0xf]
    %v164 = vld [vmem:[#allocation5 + $0x30] sm:$0xf]
    %v165 = vld [vmem:[#allocation5 + $0x34] sm:$0xf]
    %v166 = vld [vmem:[#allocation5 + $0x38] sm:$0xf]
    %v167 = vld [vmem:[#allocation5 + $0x3c] sm:$0xf]
    %v168 = vld [vmem:[#allocation7] sm:$0x1]
    %v170 = vperm.slane %v168, 0
    %v188 = vunpack.c.l.b16 %v152
    %v189 = vunpack.c.l.b16 %v153
    %v190 = vunpack.c.l.b16 %v154
    %v191 = vunpack.c.l.b16 %v155
    %v192 = vunpack.c.l.b16 %v156
    %v193 = vunpack.c.l.b16 %v157
    %v194 = vunpack.c.l.b16 %v158
    %v195 = vunpack.c.l.b16 %v159
    %v196 = vunpack.c.l.b16 %v160
    %v197 = vunpack.c.l.b16 %v161
    %v198 = vunpack.c.l.b16 %v162
    %v199 = vunpack.c.l.b16 %v163
    %v200 = vunpack.c.l.b16 %v164
    %v201 = vunpack.c.l.b16 %v165
    %v202 = vunpack.c.l.b16 %v166
    %v203 = vunpack.c.l.b16 %v167
    %v204 = vpack.c.b16 %v189, %v188
    %v205 = vpack.c.b16 %v191, %v190
    %v206 = vpack.c.b16 %v193, %v192
    %v207 = vpack.c.b16 %v195, %v194
    %v208 = vpack.c.b16 %v197, %v196
    %v209 = vpack.c.b16 %v199, %v198
    %v210 = vpack.c.b16 %v201, %v200
    %v211 = vpack.c.b16 %v203, %v202
    %220 = vmatpush.bf16.msra.mxu0 %v211
    %221 = vmatpush.bf16.msra.mxu0 %v210
    %222 = vmatpush.bf16.msra.mxu0 %v209
    %223 = vmatpush.bf16.msra.mxu0 %v208
    %224 = vmatpush.bf16.msra.mxu0 %v207
    %225 = vmatpush.bf16.msra.mxu0 %v206
    %226 = vmatpush.bf16.msra.mxu0 %v205
    %227 = vmatpush.bf16.msra.mxu0 %v204
    %228 = vmatmul.bf16.gmra.mxu0 %v151
    %v229 = vpop.f32.mrf.mxu0
    %v230 = vadd.f32 %v170, %v229
    %v231 = vpop.f32.mrf.mxu0
    %232 = vdwg.mxu0
    %v233 = vld [vmem:[%s3] sm:$0x1]
    %v234 = vld [vmem:[#allocation8] sm:$0x1]
    %v235 = vld [vmem:[%s6] sm:$0x1]
    %v236 = vld [vmem:[%s8] sm:$0x1]
    %237 = vadd.xlane.f32.xlu0 %v230
    %v238 = vpop.xlane.xlu0 %237
    %v239 = vmul.f32 %v230, %v230
    %240 = vadd.xlane.f32.xlu0 %v239
    %v241 = vpop.xlane.xlu0 %240
    %v242 = vmul.f32 %v238, 0.03125
    %v243 = vmul.f32 %v241, 0.03125
    %v244 = vmul.f32 %v242, %v242
    %v245 = vsub.f32 %v243, %v244
    %v246 = vmax.f32 %v245, 0.0
    %v247 = vsub.f32 %v230, %v242
    %v248 = vadd.f32 %v246, 1e-05
    %v249 = vrsqrt.pop %v248
    %v250 = vmul.f32 %v249, %v248
    %v251 = vmul.f32 %v250, %v249
    %v252 = vmul.f32 0.5, %v251
    %v253 = vsub.f32 1.5, %v252
    %v254 = vmul.f32 %v249, %v253
    %vm255 = vweird.f32 %v248
    %vm256 = vweird.f32 %v249
    %vm257 = vmor %vm255, %vm256
    %v258 = vsel %vm257, %v249, %v254
    %v259 = vmul.f32 %v247, %v258
    %v261 = vperm.slane %v233, 0
    %v263 = vmul.f32 %v259, %v261
    %v265 = vperm.slane %v234, 0
    %v267 = vadd.f32 %v263, %v265
    %v268 = vpack.c.bf16 %v267, %v267
    %v269 = vld [vmem:[#allocation10] sm:$0xf]
    %v270 = vld [vmem:[#allocation10 + $0x4] sm:$0xf]
    %v271 = vld [vmem:[#allocation10 + $0x8] sm:$0xf]
    %v272 = vld [vmem:[#allocation10 + $0xc] sm:$0xf]
    %v273 = vld [vmem:[#allocation10 + $0x10] sm:$0xf]
    %v274 = vld [vmem:[#allocation10 + $0x14] sm:$0xf]
    %v275 = vld [vmem:[#allocation10 + $0x18] sm:$0xf]
    %v276 = vld [vmem:[#allocation10 + $0x1c] sm:$0xf]
    %v277 = vld [vmem:[#allocation10 + $0x20] sm:$0xf]
    %v278 = vld [vmem:[#allocation10 + $0x24] sm:$0xf]
    %v279 = vld [vmem:[#allocation10 + $0x28] sm:$0xf]
    %v280 = vld [vmem:[#allocation10 + $0x2c] sm:$0xf]
    %v281 = vld [vmem:[#allocation10 + $0x30] sm:$0xf]
    %v282 = vld [vmem:[#allocation10 + $0x34] sm:$0xf]
    %v283 = vld [vmem:[#allocation10 + $0x38] sm:$0xf]
    %v284 = vld [vmem:[#allocation10 + $0x3c] sm:$0xf]
    %v286 = vperm.slane %v235, 0
    %v304 = vunpack.c.l.b16 %v269
    %v305 = vunpack.c.l.b16 %v270
    %v306 = vunpack.c.l.b16 %v271
    %v307 = vunpack.c.l.b16 %v272
    %v308 = vunpack.c.l.b16 %v273
    %v309 = vunpack.c.l.b16 %v274
    %v310 = vunpack.c.l.b16 %v275
    %v311 = vunpack.c.l.b16 %v276
    %v312 = vunpack.c.l.b16 %v277
    %v313 = vunpack.c.l.b16 %v278
    %v314 = vunpack.c.l.b16 %v279
    %v315 = vunpack.c.l.b16 %v280
    %v316 = vunpack.c.l.b16 %v281
    %v317 = vunpack.c.l.b16 %v282
    %v318 = vunpack.c.l.b16 %v283
    %v319 = vunpack.c.l.b16 %v284
    %v320 = vpack.c.b16 %v305, %v304
    %v321 = vpack.c.b16 %v307, %v306
    %v322 = vpack.c.b16 %v309, %v308
    %v323 = vpack.c.b16 %v311, %v310
    %v324 = vpack.c.b16 %v313, %v312
    %v325 = vpack.c.b16 %v315, %v314
    %v326 = vpack.c.b16 %v317, %v316
    %v327 = vpack.c.b16 %v319, %v318
    %336 = vmatpush.bf16.msra.mxu0 %v327
    %337 = vmatpush.bf16.msra.mxu0 %v326
    %338 = vmatpush.bf16.msra.mxu0 %v325
    %339 = vmatpush.bf16.msra.mxu0 %v324
    %340 = vmatpush.bf16.msra.mxu0 %v323
    %341 = vmatpush.bf16.msra.mxu0 %v322
    %342 = vmatpush.bf16.msra.mxu0 %v321
    %343 = vmatpush.bf16.msra.mxu0 %v320
    %344 = vmatmul.bf16.gmra.mxu0 %v268
    %v345 = vpop.f32.mrf.mxu0
    %v346 = vadd.f32 %v286, %v345
    %v347 = vpop.f32.mrf.mxu0
    %348 = vdwg.mxu0
    %v349 = vmax.f32 %v346, 0.0
    %v350 = vpack.c.bf16 %v349, %v349
    %v351 = vld [vmem:[#allocation11] sm:$0xf]
    %v352 = vld [vmem:[#allocation11 + $0x4] sm:$0xf]
    %v353 = vld [vmem:[#allocation11 + $0x8] sm:$0xf]
    %v354 = vld [vmem:[#allocation11 + $0xc] sm:$0xf]
    %v355 = vld [vmem:[#allocation11 + $0x10] sm:$0xf]
    %v356 = vld [vmem:[#allocation11 + $0x14] sm:$0xf]
    %v357 = vld [vmem:[#allocation11 + $0x18] sm:$0xf]
    %v358 = vld [vmem:[#allocation11 + $0x1c] sm:$0xf]
    %v359 = vld [vmem:[#allocation11 + $0x20] sm:$0xf]
    %v360 = vld [vmem:[#allocation11 + $0x24] sm:$0xf]
    %v361 = vld [vmem:[#allocation11 + $0x28] sm:$0xf]
    %v362 = vld [vmem:[#allocation11 + $0x2c] sm:$0xf]
    %v363 = vld [vmem:[#allocation11 + $0x30] sm:$0xf]
    %v364 = vld [vmem:[#allocation11 + $0x34] sm:$0xf]
    %v365 = vld [vmem:[#allocation11 + $0x38] sm:$0xf]
    %v366 = vld [vmem:[#allocation11 + $0x3c] sm:$0xf]
    %v368 = vperm.slane %v236, 0
    %v386 = vunpack.c.l.b16 %v351
    %v387 = vunpack.c.l.b16 %v352
    %v388 = vunpack.c.l.b16 %v353
    %v389 = vunpack.c.l.b16 %v354
    %v390 = vunpack.c.l.b16 %v355
    %v391 = vunpack.c.l.b16 %v356
    %v392 = vunpack.c.l.b16 %v357
    %v393 = vunpack.c.l.b16 %v358
    %v394 = vunpack.c.l.b16 %v359
    %v395 = vunpack.c.l.b16 %v360
    %v396 = vunpack.c.l.b16 %v361
    %v397 = vunpack.c.l.b16 %v362
    %v398 = vunpack.c.l.b16 %v363
    %v399 = vunpack.c.l.b16 %v364
    %v400 = vunpack.c.l.b16 %v365
    %v401 = vunpack.c.l.b16 %v366
    %v402 = vpack.c.b16 %v387, %v386
    %v403 = vpack.c.b16 %v389, %v388
    %v404 = vpack.c.b16 %v391, %v390
    %v405 = vpack.c.b16 %v393, %v392
    %v406 = vpack.c.b16 %v395, %v394
    %v407 = vpack.c.b16 %v397, %v396
    %v408 = vpack.c.b16 %v399, %v398
    %v409 = vpack.c.b16 %v401, %v400
    %418 = vmatpush.bf16.msra.mxu0 %v409
    %419 = vmatpush.bf16.msra.mxu0 %v408
    %420 = vmatpush.bf16.msra.mxu0 %v407
    %421 = vmatpush.bf16.msra.mxu0 %v406
    %422 = vmatpush.bf16.msra.mxu0 %v405
    %423 = vmatpush.bf16.msra.mxu0 %v404
    %424 = vmatpush.bf16.msra.mxu0 %v403
    %425 = vmatpush.bf16.msra.mxu0 %v402
    %426 = vmatmul.bf16.gmra.mxu0 %v350
    %v427 = vpop.f32.mrf.mxu0
    %v428 = vadd.f32 %v368, %v427
    %v429 = vpop.f32.mrf.mxu0
    %430 = vdwg.mxu0
    %v431 = vadd.f32 %v428, %v230
    %s432 = scalar_lea.vmem %s3, 1
    %v433 = vld [vmem:[%s432] sm:$0x1]
    %s434 = scalar_lea.vmem [#allocation8], 1
    %v435 = vld [vmem:[%s434] sm:$0x1]
    %s436 = scalar_lea.vmem %s6, 1
    %v437 = vld [vmem:[%s436] sm:$0x1]
    %s438 = scalar_lea.vmem %s8, 1
    %v439 = vld [vmem:[%s438] sm:$0x1]
    %440 = vadd.xlane.f32.xlu0 %v431
    %v441 = vpop.xlane.xlu0 %440
    %v442 = vmul.f32 %v431, %v431
    %443 = vadd.xlane.f32.xlu0 %v442
    %v444 = vpop.xlane.xlu0 %443
    %v445 = vmul.f32 %v441, 0.03125
    %v446 = vmul.f32 %v444, 0.03125
    %v447 = vmul.f32 %v445, %v445
    %v448 = vsub.f32 %v446, %v447
    %v449 = vmax.f32 %v448, 0.0
    %v450 = vsub.f32 %v431, %v445
    %v451 = vadd.f32 %v449, 1e-05
    %v452 = vrsqrt.pop %v451
    %v453 = vmul.f32 %v452, %v451
    %v454 = vmul.f32 %v453, %v452
    %v455 = vmul.f32 0.5, %v454
    %v456 = vsub.f32 1.5, %v455
    %v457 = vmul.f32 %v452, %v456
    %vm458 = vweird.f32 %v451
    %vm459 = vweird.f32 %v452
    %vm460 = vmor %vm458, %vm459
    %v461 = vsel %vm460, %v452, %v457
    %v462 = vmul.f32 %v450, %v461
    %v464 = vperm.slane %v433, 0
    %v466 = vmul.f32 %v462, %v464
    %v468 = vperm.slane %v435, 0
    %v470 = vadd.f32 %v466, %v468
    %v471 = vpack.c.bf16 %v470, %v470
    %s472 = scalar_lea.vmem [#allocation10], 64
    %v473 = vld [vmem:[%s472] sm:$0xf]
    %v474 = vld [vmem:[%s472 + $0x4] sm:$0xf]
    %v475 = vld [vmem:[%s472 + $0x8] sm:$0xf]
    %v476 = vld [vmem:[%s472 + $0xc] sm:$0xf]
    %v477 = vld [vmem:[%s472 + $0x10] sm:$0xf]
    %v478 = vld [vmem:[%s472 + $0x14] sm:$0xf]
    %v479 = vld [vmem:[%s472 + $0x18] sm:$0xf]
    %v480 = vld [vmem:[%s472 + $0x1c] sm:$0xf]
    %v481 = vld [vmem:[%s472 + $0x20] sm:$0xf]
    %v482 = vld [vmem:[%s472 + $0x24] sm:$0xf]
    %v483 = vld [vmem:[%s472 + $0x28] sm:$0xf]
    %v484 = vld [vmem:[%s472 + $0x2c] sm:$0xf]
    %v485 = vld [vmem:[%s472 + $0x30] sm:$0xf]
    %v486 = vld [vmem:[%s472 + $0x34] sm:$0xf]
    %v487 = vld [vmem:[%s472 + $0x38] sm:$0xf]
    %v488 = vld [vmem:[%s472 + $0x3c] sm:$0xf]
    %v490 = vperm.slane %v437, 0
    %v508 = vunpack.c.l.b16 %v473
    %v509 = vunpack.c.l.b16 %v474
    %v510 = vunpack.c.l.b16 %v475
    %v511 = vunpack.c.l.b16 %v476
    %v512 = vunpack.c.l.b16 %v477
    %v513 = vunpack.c.l.b16 %v478
    %v514 = vunpack.c.l.b16 %v479
    %v515 = vunpack.c.l.b16 %v480
    %v516 = vunpack.c.l.b16 %v481
    %v517 = vunpack.c.l.b16 %v482
    %v518 = vunpack.c.l.b16 %v483
    %v519 = vunpack.c.l.b16 %v484
    %v520 = vunpack.c.l.b16 %v485
    %v521 = vunpack.c.l.b16 %v486
    %v522 = vunpack.c.l.b16 %v487
    %v523 = vunpack.c.l.b16 %v488
    %v524 = vpack.c.b16 %v509, %v508
    %v525 = vpack.c.b16 %v511, %v510
    %v526 = vpack.c.b16 %v513, %v512
    %v527 = vpack.c.b16 %v515, %v514
    %v528 = vpack.c.b16 %v517, %v516
    %v529 = vpack.c.b16 %v519, %v518
    %v530 = vpack.c.b16 %v521, %v520
    %v531 = vpack.c.b16 %v523, %v522
    %540 = vmatpush.bf16.msra.mxu0 %v531
    %541 = vmatpush.bf16.msra.mxu0 %v530
    %542 = vmatpush.bf16.msra.mxu0 %v529
    %543 = vmatpush.bf16.msra.mxu0 %v528
    %544 = vmatpush.bf16.msra.mxu0 %v527
    %545 = vmatpush.bf16.msra.mxu0 %v526
    %546 = vmatpush.bf16.msra.mxu0 %v525
    %547 = vmatpush.bf16.msra.mxu0 %v524
    %548 = vmatmul.bf16.gmra.mxu0 %v471
    %v549 = vpop.f32.mrf.mxu0
    %v550 = vadd.f32 %v490, %v549
    %v551 = vpop.f32.mrf.mxu0
    %552 = vdwg.mxu0
    %v553 = vmax.f32 %v550, 0.0
    %v554 = vpack.c.bf16 %v553, %v553
    %s555 = scalar_lea.vmem [#allocation11], 64
    %v556 = vld [vmem:[%s555] sm:$0xf]
    %v557 = vld [vmem:[%s555 + $0x4] sm:$0xf]
    %v558 = vld [vmem:[%s555 + $0x8] sm:$0xf]
    %v559 = vld [vmem:[%s555 + $0xc] sm:$0xf]
    %v560 = vld [vmem:[%s555 + $0x10] sm:$0xf]
    %v561 = vld [vmem:[%s555 + $0x14] sm:$0xf]
    %v562 = vld [vmem:[%s555 + $0x18] sm:$0xf]
    %v563 = vld [vmem:[%s555 + $0x1c] sm:$0xf]
    %v564 = vld [vmem:[%s555 + $0x20] sm:$0xf]
    %v565 = vld [vmem:[%s555 + $0x24] sm:$0xf]
    %v566 = vld [vmem:[%s555 + $0x28] sm:$0xf]
    %v567 = vld [vmem:[%s555 + $0x2c] sm:$0xf]
    %v568 = vld [vmem:[%s555 + $0x30] sm:$0xf]
    %v569 = vld [vmem:[%s555 + $0x34] sm:$0xf]
    %v570 = vld [vmem:[%s555 + $0x38] sm:$0xf]
    %v571 = vld [vmem:[%s555 + $0x3c] sm:$0xf]
    %v573 = vperm.slane %v439, 0
    %v591 = vunpack.c.l.b16 %v556
    %v592 = vunpack.c.l.b16 %v557
    %v593 = vunpack.c.l.b16 %v558
    %v594 = vunpack.c.l.b16 %v559
    %v595 = vunpack.c.l.b16 %v560
    %v596 = vunpack.c.l.b16 %v561
    %v597 = vunpack.c.l.b16 %v562
    %v598 = vunpack.c.l.b16 %v563
    %v599 = vunpack.c.l.b16 %v564
    %v600 = vunpack.c.l.b16 %v565
    %v601 = vunpack.c.l.b16 %v566
    %v602 = vunpack.c.l.b16 %v567
    %v603 = vunpack.c.l.b16 %v568
    %v604 = vunpack.c.l.b16 %v569
    %v605 = vunpack.c.l.b16 %v570
    %v606 = vunpack.c.l.b16 %v571
    %v607 = vpack.c.b16 %v592, %v591
    %v608 = vpack.c.b16 %v594, %v593
    %v609 = vpack.c.b16 %v596, %v595
    %v610 = vpack.c.b16 %v598, %v597
    %v611 = vpack.c.b16 %v600, %v599
    %v612 = vpack.c.b16 %v602, %v601
    %v613 = vpack.c.b16 %v604, %v603
    %v614 = vpack.c.b16 %v606, %v605
    %623 = vmatpush.bf16.msra.mxu0 %v614
    %624 = vmatpush.bf16.msra.mxu0 %v613
    %625 = vmatpush.bf16.msra.mxu0 %v612
    %626 = vmatpush.bf16.msra.mxu0 %v611
    %627 = vmatpush.bf16.msra.mxu0 %v610
    %628 = vmatpush.bf16.msra.mxu0 %v609
    %629 = vmatpush.bf16.msra.mxu0 %v608
    %630 = vmatpush.bf16.msra.mxu0 %v607
    %631 = vmatmul.bf16.gmra.mxu0 %v554
    %v632 = vpop.f32.mrf.mxu0
    %v633 = vadd.f32 %v573, %v632
    %v634 = vpop.f32.mrf.mxu0
    %635 = vdwg.mxu0
    %v636 = vadd.f32 %v633, %v431
    %v637 = vld [vmem:[%s9] sm:$0x1]
    %v638 = vld [vmem:[%s10] sm:$0x1]
    %639 = vadd.xlane.f32.xlu0 %v636
    %v640 = vpop.xlane.xlu0 %639
    %v641 = vmul.f32 %v636, %v636
    %642 = vadd.xlane.f32.xlu0 %v641
    %v643 = vpop.xlane.xlu0 %642
    %v644 = vmul.f32 %v640, 0.03125
    %v645 = vmul.f32 %v643, 0.03125
    %v646 = vmul.f32 %v644, %v644
    %v647 = vsub.f32 %v645, %v646
    %v648 = vmax.f32 %v647, 0.0
    %v649 = vsub.f32 %v636, %v644
    %v650 = vadd.f32 %v648, 1e-05
    %v651 = vrsqrt.pop %v650
    %v652 = vmul.f32 %v651, %v650
    %v653 = vmul.f32 %v652, %v651
    %v654 = vmul.f32 0.5, %v653
    %v655 = vsub.f32 1.5, %v654
    %v656 = vmul.f32 %v651, %v655
    %vm657 = vweird.f32 %v650
    %vm658 = vweird.f32 %v651
    %vm659 = vmor %vm657, %vm658
    %v660 = vsel %vm659, %v651, %v656
    %v661 = vmul.f32 %v649, %v660
    %v663 = vperm.slane %v637, 0
    %v665 = vmul.f32 %v661, %v663
    %v667 = vperm.slane %v638, 0
    %v669 = vadd.f32 %v665, %v667
    %v670 = vpack.c.bf16 %v669, %v669
    %v671 = vld [vmem:[#allocation13] sm:$0xf]
    %v672 = vld [vmem:[#allocation13 + $0x4] sm:$0xf]
    %v673 = vld [vmem:[#allocation13 + $0x8] sm:$0xf]
    %v674 = vld [vmem:[#allocation13 + $0xc] sm:$0xf]
    %v675 = vld [vmem:[#allocation13 + $0x10] sm:$0xf]
    %v676 = vld [vmem:[#allocation13 + $0x14] sm:$0xf]
    %v677 = vld [vmem:[#allocation13 + $0x18] sm:$0xf]
    %v678 = vld [vmem:[#allocation13 + $0x1c] sm:$0xf]
    %v679 = vld [vmem:[#allocation13 + $0x20] sm:$0xf]
    %v680 = vld [vmem:[#allocation13 + $0x24] sm:$0xf]
    %v681 = vld [vmem:[#allocation13 + $0x28] sm:$0xf]
    %v682 = vld [vmem:[#allocation13 + $0x2c] sm:$0xf]
    %v683 = vld [vmem:[#allocation13 + $0x30] sm:$0xf]
    %v684 = vld [vmem:[#allocation13 + $0x34] sm:$0xf]
    %v685 = vld [vmem:[#allocation13 + $0x38] sm:$0xf]
    %v686 = vld [vmem:[#allocation13 + $0x3c] sm:$0xf]
    %v687 = vld [vmem:[%s12] sm:$0x1]
    %v689 = vperm.slane %v687, 0
    %v707 = vunpack.c.l.b16 %v671
    %v708 = vunpack.c.l.b16 %v672
    %v709 = vunpack.c.l.b16 %v673
    %v710 = vunpack.c.l.b16 %v674
    %v711 = vunpack.c.l.b16 %v675
    %v712 = vunpack.c.l.b16 %v676
    %v713 = vunpack.c.l.b16 %v677
    %v714 = vunpack.c.l.b16 %v678
    %v715 = vunpack.c.l.b16 %v679
    %v716 = vunpack.c.l.b16 %v680
    %v717 = vunpack.c.l.b16 %v681
    %v718 = vunpack.c.l.b16 %v682
    %v719 = vunpack.c.l.b16 %v683
    %v720 = vunpack.c.l.b16 %v684
    %v721 = vunpack.c.l.b16 %v685
    %v722 = vunpack.c.l.b16 %v686
    %v723 = vpack.c.b16 %v708, %v707
    %v724 = vpack.c.b16 %v710, %v709
    %v725 = vpack.c.b16 %v712, %v711
    %v726 = vpack.c.b16 %v714, %v713
    %v727 = vpack.c.b16 %v716, %v715
    %v728 = vpack.c.b16 %v718, %v717
    %v729 = vpack.c.b16 %v720, %v719
    %v730 = vpack.c.b16 %v722, %v721
    %739 = vmatpush.bf16.msra.mxu0 %v730
    %740 = vmatpush.bf16.msra.mxu0 %v729
    %741 = vmatpush.bf16.msra.mxu0 %v728
    %742 = vmatpush.bf16.msra.mxu0 %v727
    %743 = vmatpush.bf16.msra.mxu0 %v726
    %744 = vmatpush.bf16.msra.mxu0 %v725
    %745 = vmatpush.bf16.msra.mxu0 %v724
    %746 = vmatpush.bf16.msra.mxu0 %v723
    %747 = vmatmul.bf16.gmra.mxu0 %v670
    %v748 = vpop.f32.mrf.mxu0
    %v749 = vadd.f32 %v689, %v748
    %v750 = vpop.f32.mrf.mxu0
    %751 = vdwg.mxu0
    %752 = vst [vmem:[#allocation14] sm:$0xff] %v749
    // Predicated region
    $region82: #{tpu_custom_call.1} parent=1 // pred_check
      _
    $region83: #{tpu_custom_call.1} parent=1 // pred_check_branch
      %754 = sbr.rel (0) target = $region85
    $region84: #{tpu_custom_call.1} parent=1 // pred_region
      %756 = vsyncadd [#allocation4], 0
      %s758 = sshll.u32 [#allocation14], 4
      %s759 = int_to_ptr.vmem [resolvable:$true] %s758
      %s760 = sshll.u32 %s13, 4
      %s761 = int_to_ptr.hbm [resolvable:$true] %s760
      %763 = dma.vmem_to_hbm [thread:$0]  %s759, 128, %s761, [#allocation4]
    $region85: #{tpu_custom_call.1} parent=1 // pred_fallthru
      _
    // Predicated region
    $region86: #{tpu_custom_call.1} parent=1 // pred_check
      _
    $region87: #{tpu_custom_call.1} parent=1 // pred_check_branch
      %765 = sbr.rel (0) target = $region89
    $region88: #{tpu_custom_call.1} parent=1 // pred_region
      %767 = dma.done [#allocation4], 128
    $region89: #{tpu_custom_call.1} parent=1 // pred_fallthru
      _
    %768 = vsyncpa [#allocation3], 1
    %769 = vsyncpa [#allocation6], 1
    %770 = vsyncpa [#allocation9], 1
    %771 = vsyncpa [#allocation12], 1
    %772 = vsyncpa [#allocation4], 1

</llo_original>
